<compile_context>
chip_gen: v7x
topology: tpu7x:2x2x1
jax: 0.10.0
libtpu: 0.0.40
codegen_flags: <defaults>
</compile_context>

<pallas_src>
import math
from functools import partial

import jax
import jax.numpy as jnp
from jax import lax
from jax.experimental import pallas as pl
from jax.experimental.pallas import tpu as pltpu


# ----------------------------------------------------------------------------
# fused GAT kernel: one grid step == one block of Bt batch elements
# ----------------------------------------------------------------------------
def _gat_kernel(alpha, h_ref, adj_ref, w_ref, a_ref, out_ref, att_ref):
    bt, n, f_in = h_ref.shape
    f_out = w_ref.shape[1]

    h = h_ref[...]                       # (Bt, N, F_in)   f32
    adj = adj_ref[...]                   # (Bt, N, N)      f32
    w = w_ref[...]                       # (F_in, F_out)   bf16, resident
    a = a_ref[...]                       # (2, F_out)      f32,  resident

    # ---- Wh = h @ W : one folded MXU matmul, bf16 inputs / f32 accumulation
    h2d = h.reshape(bt * n, f_in).astype(jnp.bfloat16)
    wh = jnp.dot(h2d, w, preferred_element_type=jnp.float32)      # (Bt*N, F_out) f32
    wh3 = wh.reshape(bt, n, f_out)                                # (Bt, N, F_out)

    # ---- attention logits: e[b,i,j] = LeakyReLU((Wh a1)[b,i] + (Wh a2)[b,j])
    # (Wh a1) stays in its natural (rows, 1) orientation; the j-indexed term
    # comes out directly lane-oriented from a batched MXU contraction with a
    # broadcast a2 operand (no sublane->lane relayout).
    wh1 = lax.dot_general(wh, a[0:1, :], (((1,), (1,)), ((), ())),
                          preferred_element_type=jnp.float32)     # (Bt*N, 1)
    wh1 = wh1.reshape(bt, n, 1)                                   # (Bt, N, 1)
    a2b = jnp.broadcast_to(a[1:2, :], (bt, n, f_out))             # (Bt, N, F_out)
    e2 = jnp.einsum('bif,bjf->bij', a2b, wh3,
                    preferred_element_type=jnp.float32)           # e2[b,i,j] = Wh[b,j]·a2
    e = wh1 + e2                                                  # (Bt, N, N)
    e = jnp.where(e > 0, e, alpha * e)                            # LeakyReLU

    # ---- adjacency-masked, numerically stable softmax over neighbors (dim=2)
    e = jnp.where(adj > 0, e, jnp.float32(-9.0e15))
    e = e - jnp.max(e, axis=-1, keepdims=True)
    p = jnp.exp(e)
    # NOTE: approx reciprocal (EUP slot) -> rows sum to 1 only to ~2^-12 rel.
    att = p * pl.reciprocal(jnp.sum(p, axis=-1, keepdims=True), approx=True)
    # TODO(synk): F.dropout(attention) is identity here (inference mode).

    # ---- h' = attention @ Wh : batched MXU matmul, bf16 inputs / f32 acc
    h_prime = jnp.einsum('bij,bjo->bio',
                         att.astype(jnp.bfloat16),
                         wh3.astype(jnp.bfloat16),
                         preferred_element_type=jnp.float32)      # (Bt, N, F_out)

    # concat=True -> ELU(h'); exp(min(x,0)) keeps the unselected branch finite.
    out_ref[...] = jnp.where(h_prime > 0, h_prime,
                             jnp.exp(jnp.minimum(h_prime, 0.0)) - 1.0)
    att_ref[...] = att


def gat_forward(h, adj, w, a, *, alpha, num_blocks=None):
    """Fused GAT forward (eval mode).

    h: (B, N, F_in) f32, adj: (B, N, N) f32, w: (F_in, F_out),
    a: (2, F_out) with a[0] == module a[:F_out, 0], a[1] == a[F_out:, 0].
    Returns (elu(h_prime), attention), matching the PyTorch module.
    """
    B, N, f_in = h.shape
    f_out = w.shape[1]
    if num_blocks is None:
        # v7x: 2 TensorCores -> keep 2 parallel grid steps when possible.
        num_blocks = 2 if (B % 2 == 0) else 1
    assert B % num_blocks == 0
    bt = B // num_blocks

    w_bf16 = w.astype(jnp.bfloat16)      # MXU operand; halves the weight DMA
    a_f32 = a.astype(jnp.float32)        # logit projections kept in f32

    kernel = partial(_gat_kernel, float(alpha))
    out, att = pl.pallas_call(
        kernel,
        out_shape=(jax.ShapeDtypeStruct((B, N, f_out), jnp.float32),
                   jax.ShapeDtypeStruct((B, N, N), jnp.float32)),
        grid=(num_blocks,),
        in_specs=[
            pl.BlockSpec((bt, N, f_in), lambda b: (b, 0, 0)),   # node features
            pl.BlockSpec((bt, N, N), lambda b: (b, 0, 0)),      # adjacency
            pl.BlockSpec((f_in, f_out), lambda b: (0, 0)),      # W: resident
            pl.BlockSpec((2, f_out), lambda b: (0, 0)),         # a: resident
        ],
        out_specs=(
            pl.BlockSpec((bt, N, f_out), lambda b: (b, 0, 0)),
            pl.BlockSpec((bt, N, N), lambda b: (b, 0, 0)),
        ),
        compiler_params=pltpu.CompilerParams(
            dimension_semantics=("parallel",)),   # split across TCs on v7x
    )(h, adj, w_bf16, a_f32)
    return out, att


# ----------------------------------------------------------------------------
# pure-JAX reference (mirrors the PyTorch forward exactly, inference mode)
# ----------------------------------------------------------------------------
def gat_reference(h, adj, w, a, alpha):
    wh = jnp.einsum('bnf,fo->bno', h, w)
    wh1 = jnp.einsum('bno,o->bn', wh, a[0])[:, :, None]      # (B, N, 1)
    wh2 = jnp.einsum('bno,o->bn', wh, a[1])[:, None, :]      # (B, 1, N)
    e = wh1 + wh2
    e = jnp.where(e > 0, e, alpha * e)
    e = jnp.where(adj > 0, e, jnp.float32(-9.0e15))
    att = jax.nn.softmax(e, axis=-1)
    h_prime = jnp.einsum('bij,bjo->bio', att, wh)
    return jnp.where(h_prime > 0, h_prime, jnp.exp(h_prime) - 1.0), att


# ----------------------------------------------------------------------------
# main
# ----------------------------------------------------------------------------
if __name__ == "__main__":
    B, N, F_IN, F_OUT = 2, 16, 16, 32
    ALPHA = 0.2  # LeakyReLU negative slope

    key = jax.random.PRNGKey(0)
    kh, kadj, kw, ka = jax.random.split(key, 4)

    # node features and a random sparse adjacency (with self-loops)
    h = jax.random.normal(kh, (B, N, F_IN), jnp.float32)
    adj = (jax.random.uniform(kadj, (B, N, N)) > 0.5).astype(jnp.float32)
    adj = jnp.maximum(adj, jnp.eye(N, dtype=jnp.float32)[None])

    # xavier_uniform-style init (gain=1.414), matching the module's init scheme
    bw = 1.414 * math.sqrt(6.0 / (F_IN + F_OUT))
    w = jax.random.uniform(kw, (F_IN, F_OUT), jnp.float32, -bw, bw)
    ba = 1.414 * math.sqrt(6.0 / (2 * F_OUT + 1))
    a = jax.random.uniform(ka, (2, F_OUT), jnp.float32, -ba, ba)

    fwd = jax.jit(partial(gat_forward, alpha=ALPHA))
    out, att = fwd(h, adj, w, a)
    out, att = jax.block_until_ready((out, att))

    ref_out, ref_att = gat_reference(h, adj, w, a, ALPHA)

    assert out.shape == (B, N, F_OUT)
    assert att.shape == (B, N, N)
    assert bool(jnp.all(jnp.isfinite(out)))
    # tolerance relaxed from pure-f32 (2e-2) because the MXU matmuls now use
    # bf16 operands with f32 accumulation, per the performance review.
    assert bool(jnp.allclose(out, ref_out, rtol=3e-2, atol=3e-2))
    assert bool(jnp.allclose(att, ref_att, rtol=3e-2, atol=3e-2))
    print("KERNEL_OK")
</pallas_src>

<mosaic_0001>
module attributes {stable_mosaic.version = 11 : i64} {
  func.func @_gat_kernel(%arg0: i32, %arg1: memref<1x16x16xf32, #tpu.memory_space<vmem>>, %arg2: memref<1x16x16xf32, #tpu.memory_space<vmem>>, %arg3: memref<16x32xbf16, #tpu.memory_space<vmem>>, %arg4: memref<2x32xf32, #tpu.memory_space<vmem>>, %arg5: memref<1x16x32xf32, #tpu.memory_space<vmem>>, %arg6: memref<1x16x16xf32, #tpu.memory_space<vmem>>) attributes {dimension_semantics = [#tpu.dimension_semantics<parallel>], iteration_bounds = array<i64: 2>, scalar_prefetch = 0 : i64, scratch_operands = 0 : i64, tpu.core_type = #tpu.core_type<tc>, window_params = [{transform_indices = @transform_0, window_bounds = array<i64: 1, 16, 16>}, {transform_indices = @transform_1, window_bounds = array<i64: 1, 16, 16>}, {pipeline_mode = #tpu.pipeline_mode<synchronous>, transform_indices = @transform_2, window_bounds = array<i64: 16, 32>}, {pipeline_mode = #tpu.pipeline_mode<synchronous>, transform_indices = @transform_3, window_bounds = array<i64: 2, 32>}, {transform_indices = @transform_4, window_bounds = array<i64: 1, 16, 32>}, {transform_indices = @transform_5, window_bounds = array<i64: 1, 16, 16>}]} {
    %c0 = arith.constant 0 : index
    %c0_0 = arith.constant 0 : index
    %c0_1 = arith.constant 0 : index
    %0 = vector.load %arg1[%c0, %c0_0, %c0_1] : memref<1x16x16xf32, #tpu.memory_space<vmem>>, vector<1x16x16xf32>
    %c0_2 = arith.constant 0 : index
    %c0_3 = arith.constant 0 : index
    %c0_4 = arith.constant 0 : index
    %1 = vector.load %arg2[%c0_2, %c0_3, %c0_4] : memref<1x16x16xf32, #tpu.memory_space<vmem>>, vector<1x16x16xf32>
    %c0_5 = arith.constant 0 : index
    %c0_6 = arith.constant 0 : index
    %2 = vector.load %arg3[%c0_5, %c0_6] : memref<16x32xbf16, #tpu.memory_space<vmem>>, vector<16x32xbf16>
    %c0_7 = arith.constant 0 : index
    %c0_8 = arith.constant 0 : index
    %3 = vector.load %arg4[%c0_7, %c0_8] : memref<2x32xf32, #tpu.memory_space<vmem>>, vector<2x32xf32>
    %4 = vector.shape_cast %0 : vector<1x16x16xf32> to vector<16x16xf32>
    %5 = arith.truncf %4 : vector<16x16xf32> to vector<16x16xbf16>
    %cst = arith.constant dense<0.000000e+00> : vector<16x32xf32>
    %6 = tpu.matmul %5, %2, %cst {dimension_numbers = #tpu.dot_dimension_numbers<[1], [0], [0], [1], [0, 0, 1, 1], [], []>} : vector<16x16xbf16>, vector<16x32xbf16>, vector<16x32xf32> -> vector<16x32xf32>
    %7 = vector.shape_cast %6 : vector<16x32xf32> to vector<1x16x32xf32>
    %8 = vector.extract_strided_slice %3 {offsets = [0, 0], sizes = [1, 32], strides = [1, 1]} : vector<2x32xf32> to vector<1x32xf32>
    %cst_9 = arith.constant dense<0.000000e+00> : vector<16x1xf32>
    %9 = tpu.matmul %6, %8, %cst_9 {dimension_numbers = #tpu.dot_dimension_numbers<[1], [1], [0], [0], [0, 0, 1, 0], [], []>} : vector<16x32xf32>, vector<1x32xf32>, vector<16x1xf32> -> vector<16x1xf32>
    %10 = vector.shape_cast %9 : vector<16x1xf32> to vector<1x16x1xf32>
    %11 = vector.extract_strided_slice %3 {offsets = [1, 0], sizes = [1, 32], strides = [1, 1]} : vector<2x32xf32> to vector<1x32xf32>
    %12 = vector.shape_cast %11 : vector<1x32xf32> to vector<1x1x32xf32>
    %13 = vector.broadcast %12 : vector<1x1x32xf32> to vector<1x16x32xf32>
    "tpu.trace_start"() <{level = 10 : i32, message = "bif,bjf->bij"}> : () -> ()
    %cst_10 = arith.constant dense<0.000000e+00> : vector<1x16x16xf32>
    %14 = tpu.matmul %13, %7, %cst_10 {dimension_numbers = #tpu.dot_dimension_numbers<[2], [2], [1], [1], [0, 0, 0, 1, 1, 1], [0], [0]>} : vector<1x16x32xf32>, vector<1x16x32xf32>, vector<1x16x16xf32> -> vector<1x16x16xf32>
    "tpu.trace_stop"() : () -> ()
    %15 = vector.broadcast %10 : vector<1x16x1xf32> to vector<1x16x16xf32>
    %16 = arith.addf %15, %14 : vector<1x16x16xf32>
    %cst_11 = arith.constant 0.000000e+00 : f32
    %17 = vector.broadcast %cst_11 : f32 to vector<1x16x16xf32>
    %18 = arith.cmpf ogt, %16, %17 : vector<1x16x16xf32>
    %cst_12 = arith.constant 2.000000e-01 : f32
    %19 = vector.broadcast %cst_12 : f32 to vector<1x16x16xf32>
    %20 = arith.mulf %19, %16 : vector<1x16x16xf32>
    %21 = arith.select %18, %16, %20 : vector<1x16x16xi1>, vector<1x16x16xf32>
    %cst_13 = arith.constant 0.000000e+00 : f32
    %22 = vector.broadcast %cst_13 : f32 to vector<1x16x16xf32>
    %23 = arith.cmpf ogt, %1, %22 : vector<1x16x16xf32>
    %cst_14 = arith.constant -9.000000e+15 : f32
    %24 = vector.broadcast %cst_14 : f32 to vector<1x16x16xf32>
    %25 = arith.select %23, %21, %24 : vector<1x16x16xi1>, vector<1x16x16xf32>
    %cst_15 = arith.constant dense<0xFF800000> : vector<1x16xf32>
    %26 = vector.multi_reduction <maximumf>, %25, %cst_15 [2] : vector<1x16x16xf32> to vector<1x16xf32>
    %27 = vector.shape_cast %26 : vector<1x16xf32> to vector<1x16x1xf32>
    %28 = vector.broadcast %27 : vector<1x16x1xf32> to vector<1x16x16xf32>
    %29 = arith.subf %25, %28 : vector<1x16x16xf32>
    %30 = math.exp %29 : vector<1x16x16xf32>
    %cst_16 = arith.constant dense<0.000000e+00> : vector<1x16xf32>
    %31 = vector.multi_reduction <add>, %30, %cst_16 [2] : vector<1x16x16xf32> to vector<1x16xf32>
    %32 = vector.shape_cast %31 : vector<1x16xf32> to vector<1x16x1xf32>
    %33 = tpu.reciprocal %32 {approx = true} : vector<1x16x1xf32> -> vector<1x16x1xf32>
    %34 = vector.broadcast %33 : vector<1x16x1xf32> to vector<1x16x16xf32>
    %35 = arith.mulf %30, %34 : vector<1x16x16xf32>
    %36 = arith.truncf %35 : vector<1x16x16xf32> to vector<1x16x16xbf16>
    %37 = arith.truncf %7 : vector<1x16x32xf32> to vector<1x16x32xbf16>
    "tpu.trace_start"() <{level = 10 : i32, message = "bij,bjo->bio"}> : () -> ()
    %cst_17 = arith.constant dense<0.000000e+00> : vector<1x16x32xf32>
    %38 = tpu.matmul %36, %37, %cst_17 {dimension_numbers = #tpu.dot_dimension_numbers<[2], [1], [1], [2], [0, 0, 0, 1, 1, 2], [0], [0]>} : vector<1x16x16xbf16>, vector<1x16x32xbf16>, vector<1x16x32xf32> -> vector<1x16x32xf32>
    %cst_18 = arith.constant 0.000000e+00 : f32
    "tpu.trace_stop"() : () -> ()
    %39 = vector.broadcast %cst_18 : f32 to vector<1x16x32xf32>
    %40 = arith.cmpf ogt, %38, %39 : vector<1x16x32xf32>
    %cst_19 = arith.constant 0.000000e+00 : f32
    %41 = vector.broadcast %cst_19 : f32 to vector<1x16x32xf32>
    %42 = arith.minimumf %38, %41 : vector<1x16x32xf32>
    %43 = math.exp %42 : vector<1x16x32xf32>
    %cst_20 = arith.constant 1.000000e+00 : f32
    %44 = vector.broadcast %cst_20 : f32 to vector<1x16x32xf32>
    %45 = arith.subf %43, %44 : vector<1x16x32xf32>
    %46 = arith.select %40, %38, %45 : vector<1x16x32xi1>, vector<1x16x32xf32>
    %c0_21 = arith.constant 0 : index
    %c0_22 = arith.constant 0 : index
    %c0_23 = arith.constant 0 : index
    %47 = vector.load %arg5[%c0_21, %c0_22, %c0_23] : memref<1x16x32xf32, #tpu.memory_space<vmem>>, vector<1x16x32xf32>
    tpu.vector_store %arg5[%c0_21, %c0_22, %c0_23], %46 {strides = array<i32>} : memref<1x16x32xf32, #tpu.memory_space<vmem>>, vector<1x16x32xf32>,
    %c0_24 = arith.constant 0 : index
    %c0_25 = arith.constant 0 : index
    %c0_26 = arith.constant 0 : index
    %48 = vector.load %arg6[%c0_24, %c0_25, %c0_26] : memref<1x16x16xf32, #tpu.memory_space<vmem>>, vector<1x16x16xf32>
    tpu.vector_store %arg6[%c0_24, %c0_25, %c0_26], %35 {strides = array<i32>} : memref<1x16x16xf32, #tpu.memory_space<vmem>>, vector<1x16x16xf32>,
    return
  }
  func.func @transform_0(%arg0: i32) -> (i32, i32, i32) {
    %c0_i32 = arith.constant 0 : i32
    %c0_i32_0 = arith.constant 0 : i32
    %c0_i32_1 = arith.constant 0 : i32
    return %arg0, %c0_i32, %c0_i32_0 : i32, i32, i32
  }
  func.func @transform_1(%arg0: i32) -> (i32, i32, i32) {
    %c0_i32 = arith.constant 0 : i32
    %c0_i32_0 = arith.constant 0 : i32
    %c0_i32_1 = arith.constant 0 : i32
    return %arg0, %c0_i32, %c0_i32_0 : i32, i32, i32
  }
  func.func @transform_2(%arg0: i32) -> (i32, i32) {
    %c0_i32 = arith.constant 0 : i32
    %c0_i32_0 = arith.constant 0 : i32
    %c0_i32_1 = arith.constant 0 : i32
    return %c0_i32, %c0_i32_0 : i32, i32
  }
  func.func @transform_3(%arg0: i32) -> (i32, i32) {
    %c0_i32 = arith.constant 0 : i32
    %c0_i32_0 = arith.constant 0 : i32
    %c0_i32_1 = arith.constant 0 : i32
    return %c0_i32, %c0_i32_0 : i32, i32
  }
  func.func @transform_4(%arg0: i32) -> (i32, i32, i32) {
    %c0_i32 = arith.constant 0 : i32
    %c0_i32_0 = arith.constant 0 : i32
    %c0_i32_1 = arith.constant 0 : i32
    return %arg0, %c0_i32, %c0_i32_0 : i32, i32, i32
  }
  func.func @transform_5(%arg0: i32) -> (i32, i32, i32) {
    %c0_i32 = arith.constant 0 : i32
    %c0_i32_0 = arith.constant 0 : i32
    %c0_i32_1 = arith.constant 0 : i32
    return %arg0, %c0_i32, %c0_i32_0 : i32, i32, i32
  }
}

</mosaic_0001>

<llo_original>
// kernel: gat_forward.1
$region0: #{gat_forward.1}
  #allocation0 [shape = 'u32[]', space=smem, size = 0x4, offset = 0x4, fixed_abs, tag = 'smem constant byte address 0x4 - core index']
  #allocation1 [shape = 'u32[144,128]{1,0:T(1,128)}', space=vmem, size = 0x12000, scoped, tag = 'internal scratch']
  %s0 = inlined_call_operand.hbm [shape: f32[2,16,16], index: 0, kind: input, shape index: {}]
  %s1 = inlined_call_operand.hbm [shape: f32[2,16,16], index: 1, kind: input, shape index: {}]
  %s2 = inlined_call_operand.vmem [shape: bf16[16,32], index: 2, kind: input, shape index: {}]
  %s3 = inlined_call_operand.vmem [shape: f32[2,32], index: 3, kind: input, shape index: {}]
  %s4 = inlined_call_operand.hbm [shape: f32[2,16,32], index: 4, kind: output, shape index: {0}]
  %s5 = inlined_call_operand.hbm [shape: f32[2,16,16], index: 5, kind: output, shape index: {1}]
  %6 = xla_tuple %s4, %s5
  %s7 = sld [smem:[#allocation0]]
  $region65: #{gat_forward.1} parent=0
    _
  %s9 = ssub.s32 1, %s7
  %s10 = scalar_select 0, %s9, %s7
  $region1: #{gat_forward.1} parent=0
    #allocation2 [shape = 'u8[16384]{0}', space=vmem, size = 0x4000, scoped, tag = 'input window, operand 0']
    #allocation3 [shape = 's32[2]{0}', space=sflag, size = 0x8, scoped, tag = 'scoped memory for gat_forward.1']
    #allocation4 [shape = 's32[2]{0}', space=sflag, size = 0x8, scoped, tag = 'scoped memory for gat_forward.1']
    #allocation5 [shape = 'u8[16384]{0}', space=vmem, size = 0x4000, scoped, tag = 'input window, operand 1']
    #allocation6 [shape = 's32[2]{0}', space=sflag, size = 0x8, scoped, tag = 'scoped memory for gat_forward.1']
    #allocation7 [shape = 'u8[16384]{0}', space=vmem, size = 0x4000, scoped, tag = 'output window, operand 0']
    #allocation8 [shape = 'u8[16384]{0}', space=vmem, size = 0x4000, scoped, tag = 'output window, operand 1']
    #allocation9 [shape = 's32[2]{0}', space=sflag, size = 0x8, scoped, tag = 'scoped memory for gat_forward.1']
    %11 = vsyncpa [#allocation3], 0
    %s12 = scalar_lea.sflag [#allocation3], 1
    %13 = vsyncpa %s12, 0
    %14 = vsyncpa [#allocation6], 0
    %s15 = scalar_lea.sflag [#allocation6], 1
    %16 = vsyncpa %s15, 0
    %17 = vsyncpa [#allocation4], 0
    %s18 = scalar_lea.sflag [#allocation4], 1
    %19 = vsyncpa %s18, 0
    %20 = vsyncpa [#allocation9], 0
    %s21 = scalar_lea.sflag [#allocation9], 1
    %22 = vsyncpa %s21, 0
    loop: start=0, step=1, limit=4
    $region2: #{gat_forward.1} parent=1 // loop_pre_header
      _
    $region3: #{gat_forward.1} parent=1 // loop_header
      %s24 = sphi 0, %s28
      %p25 = scmp.ge.s32.totalorder %s24, 4
      %s34 = sphi 0, %s36
      %s37 = sphi 0, %s34
      %s38 = sphi 0, %s37
      %s54 = sphi 0, %s38
      %s60 = sphi 0, %s62
      %s63 = sphi 0, %s60
      %s64 = sphi 0, %s63
      %s80 = sphi 0, %s64
      %s84 = sphi 0, %s84
      %s86 = sphi 0, %s84
      %s87 = sphi 0, %s86
      %s101 = sphi 0, %s87
      %s105 = sphi 0, %s105
      %s107 = sphi 0, %s105
      %s108 = sphi 0, %s107
      %s122 = sphi 0, %s108
      %s128 = sphi 0, %s130
      %s131 = sphi 0, %s128
      %s132 = sphi 0, %s131
      %s148 = sphi 0, %s132
      %s154 = sphi 0, %s156
      %s157 = sphi 0, %s154
      %s158 = sphi 0, %s157
      %s174 = sphi 0, %s158
    $region4: #{gat_forward.1} parent=1 // loop_header_branch
      %27 = sbr.rel (%p25) target = $region8
    $region5: #{gat_forward.1} parent=1 // loop_body
      %s29 = ssub.s32 %s24, 1
      %s30 = ssub.s32 %s24, 2
      %s31 = sadd.s32 %s24, 1
      %s32 = ssub.s32 %s24, %s31
      %p33 = scmp.eq.s32.totalorder %s32, 0
      %s35 = sadd.s32 %s34, 1
      %s36 = scalar_select %p33, %s34, %s35
      %p39 = pneg %p33
      %p40 = scmp.eq.s32.totalorder %s24, 1
      %p41 = por %p39, %p40
      %p42 = scmp.ne.s32.totalorder %s34, %s37
      %p43 = scmp.eq.s32.totalorder %s24, 0
      %p44 = por %p42, %p43
      %p45 = scmp.ne.s32.totalorder %s34, %s37
      %p46 = scmp.eq.s32.totalorder %s29, 1
      %p47 = por %p45, %p46
      %p48 = scmp.ne.s32.totalorder %s37, %s38
      %p49 = scmp.eq.s32.totalorder %s29, 0
      %p50 = por %p48, %p49
      %p51 = scmp.ne.s32.totalorder %s37, %s38
      %p52 = scmp.eq.s32.totalorder %s30, 1
      %p53 = por %p51, %p52
      %p55 = scmp.ne.s32.totalorder %s38, %s54
      %p56 = scmp.eq.s32.totalorder %s30, 0
      %p57 = por %p55, %p56
      %s58 = ssub.s32 %s24, %s31
      %p59 = scmp.eq.s32.totalorder %s58, 0
      %s61 = sadd.s32 %s60, 1
      %s62 = scalar_select %p59, %s60, %s61
      %p65 = pneg %p59
      %p66 = scmp.eq.s32.totalorder %s24, 1
      %p67 = por %p65, %p66
      %p68 = scmp.ne.s32.totalorder %s60, %s63
      %p69 = scmp.eq.s32.totalorder %s24, 0
      %p70 = por %p68, %p69
      %p71 = scmp.ne.s32.totalorder %s60, %s63
      %p72 = scmp.eq.s32.totalorder %s29, 1
      %p73 = por %p71, %p72
      %p74 = scmp.ne.s32.totalorder %s63, %s64
      %p75 = scmp.eq.s32.totalorder %s29, 0
      %p76 = por %p74, %p75
      %p77 = scmp.ne.s32.totalorder %s63, %s64
      %p78 = scmp.eq.s32.totalorder %s30, 1
      %p79 = por %p77, %p78
      %p81 = scmp.ne.s32.totalorder %s64, %s80
      %p82 = scmp.eq.s32.totalorder %s30, 0
      %p83 = por %p81, %p82
      %s85 = sadd.s32 %s84, 1
      %p88 = scmp.eq.s32.totalorder %s24, 1
      %p89 = scmp.ne.s32.totalorder %s84, %s86
      %p90 = scmp.eq.s32.totalorder %s24, 0
      %p91 = por %p89, %p90
      %p92 = scmp.ne.s32.totalorder %s84, %s86
      %p93 = scmp.eq.s32.totalorder %s29, 1
      %p94 = por %p92, %p93
      %p95 = scmp.ne.s32.totalorder %s86, %s87
      %p96 = scmp.eq.s32.totalorder %s29, 0
      %p97 = por %p95, %p96
      %p98 = scmp.ne.s32.totalorder %s86, %s87
      %p99 = scmp.eq.s32.totalorder %s30, 1
      %p100 = por %p98, %p99
      %p102 = scmp.ne.s32.totalorder %s87, %s101
      %p103 = scmp.eq.s32.totalorder %s30, 0
      %p104 = por %p102, %p103
      %s106 = sadd.s32 %s105, 1
      %p109 = scmp.eq.s32.totalorder %s24, 1
      %p110 = scmp.ne.s32.totalorder %s105, %s107
      %p111 = scmp.eq.s32.totalorder %s24, 0
      %p112 = por %p110, %p111
      %p113 = scmp.ne.s32.totalorder %s105, %s107
      %p114 = scmp.eq.s32.totalorder %s29, 1
      %p115 = por %p113, %p114
      %p116 = scmp.ne.s32.totalorder %s107, %s108
      %p117 = scmp.eq.s32.totalorder %s29, 0
      %p118 = por %p116, %p117
      %p119 = scmp.ne.s32.totalorder %s107, %s108
      %p120 = scmp.eq.s32.totalorder %s30, 1
      %p121 = por %p119, %p120
      %p123 = scmp.ne.s32.totalorder %s108, %s122
      %p124 = scmp.eq.s32.totalorder %s30, 0
      %p125 = por %p123, %p124
      %s126 = ssub.s32 %s24, %s31
      %p127 = scmp.eq.s32.totalorder %s126, 0
      %s129 = sadd.s32 %s128, 1
      %s130 = scalar_select %p127, %s128, %s129
      %p133 = pneg %p127
      %p134 = scmp.eq.s32.totalorder %s24, 1
      %p135 = por %p133, %p134
      %p136 = scmp.ne.s32.totalorder %s128, %s131
      %p137 = scmp.eq.s32.totalorder %s24, 0
      %p138 = por %p136, %p137
      %p139 = scmp.ne.s32.totalorder %s128, %s131
      %p140 = scmp.eq.s32.totalorder %s29, 1
      %p141 = por %p139, %p140
      %p142 = scmp.ne.s32.totalorder %s131, %s132
      %p143 = scmp.eq.s32.totalorder %s29, 0
      %p144 = por %p142, %p143
      %p145 = scmp.ne.s32.totalorder %s131, %s132
      %p146 = scmp.eq.s32.totalorder %s30, 1
      %p147 = por %p145, %p146
      %p149 = scmp.ne.s32.totalorder %s132, %s148
      %p150 = scmp.eq.s32.totalorder %s30, 0
      %p151 = por %p149, %p150
      %s152 = ssub.s32 %s24, %s31
      %p153 = scmp.eq.s32.totalorder %s152, 0
      %s155 = sadd.s32 %s154, 1
      %s156 = scalar_select %p153, %s154, %s155
      %p159 = pneg %p153
      %p160 = scmp.eq.s32.totalorder %s24, 1
      %p161 = por %p159, %p160
      %p162 = scmp.ne.s32.totalorder %s154, %s157
      %p163 = scmp.eq.s32.totalorder %s24, 0
      %p164 = por %p162, %p163
      %p165 = scmp.ne.s32.totalorder %s154, %s157
      %p166 = scmp.eq.s32.totalorder %s29, 1
      %p167 = por %p165, %p166
      %p168 = scmp.ne.s32.totalorder %s157, %s158
      %p169 = scmp.eq.s32.totalorder %s29, 0
      %p170 = por %p168, %p169
      %p171 = scmp.ne.s32.totalorder %s157, %s158
      %p172 = scmp.eq.s32.totalorder %s30, 1
      %p173 = por %p171, %p172
      %p175 = scmp.ne.s32.totalorder %s158, %s174
      %p176 = scmp.eq.s32.totalorder %s30, 0
      %p177 = por %p175, %p176
      %p178 = scmp.le.s32.totalorder 1, %s24
      %p179 = scmp.lt.s32.totalorder %s24, 3
      %p180 = pnand %p178, %p179
      %p181 = pneg %p180
      // Predicated region
      $region9: #{gat_forward.1} parent=5 // pred_check
        _
      $region10: #{gat_forward.1} parent=5 // pred_check_branch
        %183 = sbr.rel (%p180) target = $region12
      $region11: #{gat_forward.1} parent=5 // pred_region
        %s184 = ssub.s32 %s24, 1
        // Predicated region
        $region13: #{gat_forward.1} parent=11 // pred_check
          %p185 = pneg %p97
        $region14: #{gat_forward.1} parent=11 // pred_check_branch
          %187 = sbr.rel (%p185) target = $region16
        $region15: #{gat_forward.1} parent=11 // pred_region
          _
        $region16: #{gat_forward.1} parent=11 // pred_fallthru
          _
        // Predicated region
        $region17: #{gat_forward.1} parent=11 // pred_check
          %p188 = pneg %p118
        $region18: #{gat_forward.1} parent=11 // pred_check_branch
          %190 = sbr.rel (%p188) target = $region20
        $region19: #{gat_forward.1} parent=11 // pred_region
          _
        $region20: #{gat_forward.1} parent=11 // pred_fallthru
          _
      $region12: #{gat_forward.1} parent=5 // pred_fallthru
        _
      %p191 = scmp.lt.s32.totalorder %s24, 2
      // Predicated region
      $region21: #{gat_forward.1} parent=5 // pred_check
        %p192 = pneg %p191
      $region22: #{gat_forward.1} parent=5 // pred_check_branch
        %194 = sbr.rel (%p192) target = $region24
      $region23: #{gat_forward.1} parent=5 // pred_region
        // Predicated region
        $region25: #{gat_forward.1} parent=23 // pred_check
          %p195 = pneg %p44
        $region26: #{gat_forward.1} parent=23 // pred_check_branch
          %197 = sbr.rel (%p195) target = $region28
        $region27: #{gat_forward.1} parent=23 // pred_region
          %s198 = sand.u32 %s34, 1
          %s199 = scalar_lea.sflag [#allocation3], %s198
          %s200 = sand.u32 %s34, 1
          %s201 = smul.addr %s200, 16
          %s202 = scalar_lea.vmem [#allocation2], %s201
          %s204 = ssub.s32 256, 256
          %205 = vsyncadd %s199, %s204
          %s206 = smul.addr %s24, 2
          %s207 = smul.addr %s206, 128
          %s208 = scalar_lea.hbm %s0, %s207
          %s209 = sshll.u32 %s202, 4
          %s210 = int_to_ptr.vmem [resolvable:$true] %s209
          %215 = dma.hbm_to_vmem [thread:$0]  %s208, 256, %s210, %s199, 128, 128, 8
        $region28: #{gat_forward.1} parent=23 // pred_fallthru
          _
        // Predicated region
        $region29: #{gat_forward.1} parent=23 // pred_check
          %p216 = pneg %p70
        $region30: #{gat_forward.1} parent=23 // pred_check_branch
          %218 = sbr.rel (%p216) target = $region32
        $region31: #{gat_forward.1} parent=23 // pred_region
          %s219 = sand.u32 %s60, 1
          %s220 = scalar_lea.sflag [#allocation6], %s219
          %s221 = sand.u32 %s60, 1
          %s222 = smul.addr %s221, 16
          %s223 = scalar_lea.vmem [#allocation5], %s222
          %s225 = ssub.s32 256, 256
          %226 = vsyncadd %s220, %s225
          %s227 = smul.addr %s24, 2
          %s228 = smul.addr %s227, 128
          %s229 = scalar_lea.hbm %s1, %s228
          %s230 = sshll.u32 %s223, 4
          %s231 = int_to_ptr.vmem [resolvable:$true] %s230
          %236 = dma.hbm_to_vmem [thread:$0]  %s229, 256, %s231, %s220, 128, 128, 8
        $region32: #{gat_forward.1} parent=23 // pred_fallthru
          _
      $region24: #{gat_forward.1} parent=5 // pred_fallthru
        _
      %p237 = scmp.le.s32.totalorder 1, %s24
      %p238 = scmp.lt.s32.totalorder %s24, 3
      %p239 = pnand %p237, %p238
      %p240 = pneg %p239
      // Predicated region
      $region33: #{gat_forward.1} parent=5 // pred_check
        _
      $region34: #{gat_forward.1} parent=5 // pred_check_branch
        %242 = sbr.rel (%p239) target = $region36
      $region35: #{gat_forward.1} parent=5 // pred_region
        %s243 = ssub.s32 %s24, 1
        %s244 = sand.u32 %s37, 1
        %s245 = scalar_lea.sflag [#allocation3], %s244
        %s246 = sand.u32 %s37, 1
        %s247 = smul.addr %s246, 16
        %s248 = scalar_lea.vmem [#allocation2], %s247
        // Predicated region
        $region37: #{gat_forward.1} parent=35 // pred_check
          %p249 = pneg %p50
        $region38: #{gat_forward.1} parent=35 // pred_check_branch
          %251 = sbr.rel (%p249) target = $region40
        $region39: #{gat_forward.1} parent=35 // pred_region
          %252 = dma.done %s245, 256
        $region40: #{gat_forward.1} parent=35 // pred_fallthru
          _
        %s253 = sand.u32 %s63, 1
        %s254 = scalar_lea.sflag [#allocation6], %s253
        %s255 = sand.u32 %s63, 1
        %s256 = smul.addr %s255, 16
        %s257 = scalar_lea.vmem [#allocation5], %s256
        // Predicated region
        $region41: #{gat_forward.1} parent=35 // pred_check
          %p258 = pneg %p76
        $region42: #{gat_forward.1} parent=35 // pred_check_branch
          %260 = sbr.rel (%p258) target = $region44
        $region43: #{gat_forward.1} parent=35 // pred_region
          %261 = dma.done %s254, 256
        $region44: #{gat_forward.1} parent=35 // pred_fallthru
          _
        %s262 = sand.u32 %s37, 1
        %s263 = scalar_lea.sflag [#allocation3], %s262
        %s264 = sand.u32 %s37, 1
        %s265 = smul.addr %s264, 16
        %s266 = scalar_lea.vmem [#allocation2], %s265
        %p267 = pneg %p50
        %p268 = pneg %p47
        %s269 = sand.u32 %s63, 1
        %s270 = scalar_lea.sflag [#allocation6], %s269
        %s271 = sand.u32 %s63, 1
        %s272 = smul.addr %s271, 16
        %s273 = scalar_lea.vmem [#allocation5], %s272
        %p274 = pneg %p76
        %p275 = pneg %p73
        %p276 = pneg %p97
        %p277 = pneg %p94
        %p278 = pneg %p118
        %p279 = pneg %p115
        %p280 = pneg %p144
        %p281 = pneg %p141
        %s282 = sand.u32 %s131, 1
        %s283 = scalar_lea.sflag [#allocation4], %s282
        %s284 = sand.u32 %s131, 1
        %s285 = smul.addr %s284, 16
        %s286 = scalar_lea.vmem [#allocation7], %s285
        %p287 = pneg %p170
        %p288 = pneg %p167
        %s289 = sand.u32 %s157, 1
        %s290 = scalar_lea.sflag [#allocation9], %s289
        %s291 = sand.u32 %s157, 1
        %s292 = smul.addr %s291, 16
        %s293 = scalar_lea.vmem [#allocation8], %s292
        %v295 = vld [vmem:[%s248] sm:$0xff]
        %v296 = vld [vmem:[%s248 + $0x8] sm:$0xff]
        %v297 = vld [vmem:[%s257] sm:$0xff]
        %v298 = vld [vmem:[%s257 + $0x8] sm:$0xff]
        %v299 = vld [vmem:[%s2] sm:$0xf]
        %v300 = vld [vmem:[%s2 + $0x4] sm:$0xf]
        %v301 = vld [vmem:[%s3] sm:$0x3]
        %v302 = vpack.c.bf16 %v296, %v295
        %v305 = vunpack.c.l.b16 %v299
        %v306 = vunpack.c.l.b16 %v300
        %v307 = vpack.c.b16 %v306, %v305
        %vm309 = vcmask 130048
        %v311 = vsel %vm309, %v302, 0
        %313 = vmatprep.subr.bf16.mxu0 0
        %314 = vmatpush1.bf16.msra.mxu0 %v307
        %315 = vmatprep.subr.bf16.mxu0 0
        %316 = vmatpush1.bf16.msra.mxu0 0
        %317 = vmatprep.subr.bf16.mxu0 0
        %318 = vmatpush1.bf16.msra.mxu0 0
        %319 = vmatprep.subr.bf16.mxu0 0
        %320 = vmatpush1.bf16.msra.mxu0 0
        %321 = vmatprep.subr.bf16.mxu0 0
        %322 = vmatpush1.bf16.msra.mxu0 0
        %323 = vmatprep.subr.bf16.mxu0 0
        %324 = vmatpush1.bf16.msra.mxu0 0
        %325 = vmatprep.subr.bf16.mxu0 0
        %326 = vmatpush1.bf16.msra.mxu0 0
        %327 = vmatprep.subr.bf16.mxu0 0
        %328 = vmatpush1.bf16.msra.mxu0 0
        %329 = vmatprep.subr.bf16.mxu0 0
        %330 = vmatpush1.bf16.msra.mxu0 0
        %331 = vmatprep.subr.bf16.mxu0 0
        %332 = vmatpush1.bf16.msra.mxu0 0
        %333 = vmatprep.subr.bf16.mxu0 0
        %334 = vmatpush1.bf16.msra.mxu0 0
        %335 = vmatprep.subr.bf16.mxu0 0
        %336 = vmatpush1.bf16.msra.mxu0 0
        %337 = vmatprep.subr.bf16.mxu0 0
        %338 = vmatpush1.bf16.msra.mxu0 0
        %339 = vmatprep.subr.bf16.mxu0 0
        %340 = vmatpush1.bf16.msra.mxu0 0
        %341 = vmatprep.subr.bf16.mxu0 0
        %342 = vmatpush1.bf16.msra.mxu0 0
        %343 = vmatprep.subr.bf16.mxu0 0
        %344 = vmatpush1.bf16.msra.mxu0 0
        %345 = vmatprep.mubr.bf16.mxu0 0
        %346 = vmatmul.mubr.bf16.gmra.mrb[0].mxu0 %v311
        %v347 = vpop.f32.mrb[0].mxu0
        %v348 = vadd.f32 0.0, %v347
        %v349 = vpop.f32.mrb[0].mxu0
        %v350 = vpop.f32.mrb[0].mxu0
        %v351 = vadd.f32 0.0, %v350
        %v352 = vpop.f32.mrb[0].mxu0
        %353 = vdwg.mxu0
        %v354 = vlaneseq
        %v355 = vshrl.u32 %v354, 7
        %v356 = vsub.s32 0, %v355
        %v357 = vrot.slane %v301, %v356
        %v358 = vmul.f32 %v348, %v357
        %v359 = vmul.f32 %v351, %v357
        %vm360 = vcmask 261120
        %v361 = vsel %vm360, %v358, 0.0
        %362 = vadd.xlane.f32.xlu0 %v361
        %v363 = vpop.xlane.xlu0 %362
        %v364 = vsel %vm360, %v359, 0.0
        %365 = vadd.xlane.f32.xlu0 %v364
        %v366 = vpop.xlane.xlu0 %365
        %v367 = vlaneseq
        %v368 = vshrl.u32 %v367, 7
        %v369 = vsub.s32 1, %v368
        %v370 = vrot.slane %v301, %v369
        %v372 = vsel %vm360, %v370, 0
        %v375 = vsel %vm360, %v348, 0
        %v378 = vsel %vm360, %v351, 0
        %380 = vmatprep.subr.mxu0 0.0
        %381 = vmatpush1.xpose.msra.mxu0 %v375
        %382 = vmatprep.subr.mxu0 0.0
        %383 = vmatpush1.xpose.msra.mxu0 %v378
        %384 = vmatprep.subr.mxu0 0.0
        %385 = vmatpush1.xpose.msra.mxu0 0.0
        %386 = vmatprep.subr.mxu0 0.0
        %387 = vmatpush1.xpose.msra.mxu0 0.0
        %388 = vmatprep.subr.mxu0 0.0
        %389 = vmatpush1.xpose.msra.mxu0 0.0
        %390 = vmatprep.subr.mxu0 0.0
        %391 = vmatpush1.xpose.msra.mxu0 0.0
        %392 = vmatprep.subr.mxu0 0.0
        %393 = vmatpush1.xpose.msra.mxu0 0.0
        %394 = vmatprep.subr.mxu0 0.0
        %395 = vmatpush1.xpose.msra.mxu0 0.0
        %396 = vmatprep.subr.mxu0 0.0
        %397 = vmatpush1.xpose.msra.mxu0 0.0
        %398 = vmatprep.subr.mxu0 0.0
        %399 = vmatpush1.xpose.msra.mxu0 0.0
        %400 = vmatprep.subr.mxu0 0.0
        %401 = vmatpush1.xpose.msra.mxu0 0.0
        %402 = vmatprep.subr.mxu0 0.0
        %403 = vmatpush1.xpose.msra.mxu0 0.0
        %404 = vmatprep.subr.mxu0 0.0
        %405 = vmatpush1.xpose.msra.mxu0 0.0
        %406 = vmatprep.subr.mxu0 0.0
        %407 = vmatpush1.xpose.msra.mxu0 0.0
        %408 = vmatprep.subr.mxu0 0.0
        %409 = vmatpush1.xpose.msra.mxu0 0.0
        %410 = vmatprep.subr.mxu0 0.0
        %411 = vmatpush1.xpose.msra.mxu0 0.0
        %412 = vmatprep.subr.mxu0 0.0
        %413 = vmatpush1.xpose.msra.mxu0 0.0
        %414 = vmatprep.subr.mxu0 0.0
        %415 = vmatpush1.xpose.msra.mxu0 0.0
        %416 = vmatprep.subr.mxu0 0.0
        %417 = vmatpush1.xpose.msra.mxu0 0.0
        %418 = vmatprep.subr.mxu0 0.0
        %419 = vmatpush1.xpose.msra.mxu0 0.0
        %420 = vmatprep.subr.mxu0 0.0
        %421 = vmatpush1.xpose.msra.mxu0 0.0
        %422 = vmatprep.subr.mxu0 0.0
        %423 = vmatpush1.xpose.msra.mxu0 0.0
        %424 = vmatprep.subr.mxu0 0.0
        %425 = vmatpush1.xpose.msra.mxu0 0.0
        %426 = vmatprep.subr.mxu0 0.0
        %427 = vmatpush1.xpose.msra.mxu0 0.0
        %428 = vmatprep.subr.mxu0 0.0
        %429 = vmatpush1.xpose.msra.mxu0 0.0
        %430 = vmatprep.subr.mxu0 0.0
        %431 = vmatpush1.xpose.msra.mxu0 0.0
        %432 = vmatprep.subr.mxu0 0.0
        %433 = vmatpush1.xpose.msra.mxu0 0.0
        %434 = vmatprep.subr.mxu0 0.0
        %435 = vmatpush1.xpose.msra.mxu0 0.0
        %436 = vmatprep.subr.mxu0 0.0
        %437 = vmatpush1.xpose.msra.mxu0 0.0
        %438 = vmatprep.subr.mxu0 0.0
        %439 = vmatpush1.xpose.msra.mxu0 0.0
        %440 = vmatprep.subr.mxu0 0.0
        %441 = vmatpush1.xpose.msra.mxu0 0.0
        %442 = vmatprep.subr.mxu0 0.0
        %443 = vmatpush1.xpose.msra.mxu0 0.0
        %444 = vmatprep.mubr.f32.mxu0 0.0
        %445 = vmatmul.mubr.f32.gmra.mrb[0].mxu0 %v372
        %v446 = vpop.f32.mrb[0].mxu0
        %v447 = vadd.f32 0.0, %v446
        %v448 = vpop.f32.mrb[0].mxu0
        %449 = vmatprep.mubr.f32.mxu0 0.0
        %450 = vmatmul.mubr.f32.gmra.mrb[0].mxu0 %v372
        %v451 = vpop.f32.mrb[0].mxu0
        %v452 = vadd.f32 0.0, %v451
        %v453 = vpop.f32.mrb[0].mxu0
        %454 = vdwg.mxu0
        %v455 = vadd.f32 %v363, %v447
        %v456 = vadd.f32 %v366, %v452
        %vm457 = vcmp.gt.f32.partialorder %v455, 0.0
        %vm458 = vcmp.gt.f32.partialorder %v456, 0.0
        %v459 = vmul.f32 %v455, 0.2
        %v460 = vmul.f32 %v456, 0.2
        %v461 = vsel %vm457, %v455, %v459
        %v462 = vsel %vm458, %v456, %v460
        %vm463 = vcmp.gt.f32.partialorder %v297, 0.0
        %vm464 = vcmp.gt.f32.partialorder %v298, 0.0
        %v465 = vsel %vm463, %v461, -9e+15
        %v466 = vsel %vm464, %v462, -9e+15
        %v467 = vsel %vm309, %v465, -inf
        %468 = vmax.xlane.f32.xlu0 %v467
        %v469 = vpop.xlane.xlu0 %468
        %v470 = vsel %vm309, %v466, -inf
        %471 = vmax.xlane.f32.xlu0 %v470
        %v472 = vpop.xlane.xlu0 %471
        %v473 = vsub.f32 %v465, %v469
        %v474 = vsub.f32 %v466, %v472
        %v475 = vmul.f32 %v473, 1.442695
        %v476 = vpow.pop %v475
        %v477 = vmul.f32 %v474, 1.442695
        %v478 = vpow.pop %v477
        %v479 = vsel %vm309, %v476, 0.0
        %480 = vadd.xlane.f32.xlu0 %v479
        %v481 = vpop.xlane.xlu0 %480
        %v482 = vsel %vm309, %v478, 0.0
        %483 = vadd.xlane.f32.xlu0 %v482
        %v484 = vpop.xlane.xlu0 %483
        %v485 = vrcp.pop %v481
        %v486 = vrcp.pop %v484
        %v487 = vmul.f32 %v476, %v485
        %v488 = vmul.f32 %v478, %v486
        %v489 = vpack.c.bf16 %v488, %v487
        %v490 = vpack.c.bf16 %v351, %v348
        %v492 = vsel %vm309, %v489, 0
        %494 = vmatprep.subr.bf16.mxu0 0
        %495 = vmatpush1.bf16.msra.mxu0 %v490
        %496 = vmatprep.subr.bf16.mxu0 0
        %497 = vmatpush1.bf16.msra.mxu0 0
        %498 = vmatprep.subr.bf16.mxu0 0
        %499 = vmatpush1.bf16.msra.mxu0 0
        %500 = vmatprep.subr.bf16.mxu0 0
        %501 = vmatpush1.bf16.msra.mxu0 0
        %502 = vmatprep.subr.bf16.mxu0 0
        %503 = vmatpush1.bf16.msra.mxu0 0
        %504 = vmatprep.subr.bf16.mxu0 0
        %505 = vmatpush1.bf16.msra.mxu0 0
        %506 = vmatprep.subr.bf16.mxu0 0
        %507 = vmatpush1.bf16.msra.mxu0 0
        %508 = vmatprep.subr.bf16.mxu0 0
        %509 = vmatpush1.bf16.msra.mxu0 0
        %510 = vmatprep.subr.bf16.mxu0 0
        %511 = vmatpush1.bf16.msra.mxu0 0
        %512 = vmatprep.subr.bf16.mxu0 0
        %513 = vmatpush1.bf16.msra.mxu0 0
        %514 = vmatprep.subr.bf16.mxu0 0
        %515 = vmatpush1.bf16.msra.mxu0 0
        %516 = vmatprep.subr.bf16.mxu0 0
        %517 = vmatpush1.bf16.msra.mxu0 0
        %518 = vmatprep.subr.bf16.mxu0 0
        %519 = vmatpush1.bf16.msra.mxu0 0
        %520 = vmatprep.subr.bf16.mxu0 0
        %521 = vmatpush1.bf16.msra.mxu0 0
        %522 = vmatprep.subr.bf16.mxu0 0
        %523 = vmatpush1.bf16.msra.mxu0 0
        %524 = vmatprep.subr.bf16.mxu0 0
        %525 = vmatpush1.bf16.msra.mxu0 0
        %526 = vmatprep.mubr.bf16.mxu0 0
        %527 = vmatmul.mubr.bf16.gmra.mrb[0].mxu0 %v492
        %v528 = vpop.f32.mrb[0].mxu0
        %v529 = vadd.f32 0.0, %v528
        %v530 = vpop.f32.mrb[0].mxu0
        %v531 = vpop.f32.mrb[0].mxu0
        %v532 = vadd.f32 0.0, %v531
        %v533 = vpop.f32.mrb[0].mxu0
        %534 = vdwg.mxu0
        %vm535 = vcmp.gt.f32.partialorder %v529, 0.0
        %vm536 = vcmp.gt.f32.partialorder %v532, 0.0
        %v537 = vmin.f32 %v529, 0.0
        %v538 = vmin.f32 %v532, 0.0
        %v539 = vmul.f32 %v537, 1.442695
        %v540 = vpow.pop %v539
        %v541 = vmul.f32 %v538, 1.442695
        %v542 = vpow.pop %v541
        %v543 = vsub.f32 %v540, 1.0
        %v544 = vsub.f32 %v542, 1.0
        %v545 = vsel %vm535, %v529, %v543
        %v546 = vsel %vm536, %v532, %v544
        %547 = vst.msk [vmem:[%s286] sm:$0xff] %vm360, %v545
        %548 = vst.msk [vmem:[%s286 + $0x8] sm:$0xff] %vm360, %v546
        %549 = vst.msk [vmem:[%s293] sm:$0xff] %vm309, %v487
        %550 = vst.msk [vmem:[%s293 + $0x8] sm:$0xff] %vm309, %v488
        %s551 = sand.u32 %s131, 1
        %s552 = scalar_lea.sflag [#allocation4], %s551
        %s553 = sand.u32 %s131, 1
        %s554 = smul.addr %s553, 16
        %s555 = scalar_lea.vmem [#allocation7], %s554
        %s556 = sand.u32 %s157, 1
        %s557 = scalar_lea.sflag [#allocation9], %s556
        %s558 = sand.u32 %s157, 1
        %s559 = smul.addr %s558, 16
        %s560 = scalar_lea.vmem [#allocation8], %s559
        // Predicated region
        $region45: #{gat_forward.1} parent=35 // pred_check
          %p561 = pneg %p141
        $region46: #{gat_forward.1} parent=35 // pred_check_branch
          %563 = sbr.rel (%p561) target = $region48
        $region47: #{gat_forward.1} parent=35 // pred_region
          %s565 = ssub.s32 256, 256
          %566 = vsyncadd %s552, %s565
          %s567 = smul.addr %s29, 2
          %s568 = smul.addr %s567, 128
          %s569 = scalar_lea.hbm %s4, %s568
          %s570 = sshll.u32 %s555, 4
          %s571 = int_to_ptr.vmem [resolvable:$true] %s570
          %576 = dma.vmem_to_hbm [thread:$0]  %s571, 256, %s569, %s552, 128, 128, 8
        $region48: #{gat_forward.1} parent=35 // pred_fallthru
          _
        // Predicated region
        $region49: #{gat_forward.1} parent=35 // pred_check
          %p577 = pneg %p167
        $region50: #{gat_forward.1} parent=35 // pred_check_branch
          %579 = sbr.rel (%p577) target = $region52
        $region51: #{gat_forward.1} parent=35 // pred_region
          %s581 = ssub.s32 256, 256
          %582 = vsyncadd %s557, %s581
          %s583 = smul.addr %s29, 2
          %s584 = smul.addr %s583, 128
          %s585 = scalar_lea.hbm %s5, %s584
          %s586 = sshll.u32 %s560, 4
          %s587 = int_to_ptr.vmem [resolvable:$true] %s586
          %592 = dma.vmem_to_hbm [thread:$0]  %s587, 256, %s585, %s557, 128, 128, 8
        $region52: #{gat_forward.1} parent=35 // pred_fallthru
          _
      $region36: #{gat_forward.1} parent=5 // pred_fallthru
        _
      %p593 = scmp.le.s32.totalorder 2, %s24
      // Predicated region
      $region53: #{gat_forward.1} parent=5 // pred_check
        %p594 = pneg %p593
      $region54: #{gat_forward.1} parent=5 // pred_check_branch
        %596 = sbr.rel (%p594) target = $region56
      $region55: #{gat_forward.1} parent=5 // pred_region
        %s597 = ssub.s32 %s24, 2
        // Predicated region
        $region57: #{gat_forward.1} parent=55 // pred_check
          %p598 = pneg %p147
        $region58: #{gat_forward.1} parent=55 // pred_check_branch
          %600 = sbr.rel (%p598) target = $region60
        $region59: #{gat_forward.1} parent=55 // pred_region
          %s601 = sand.u32 %s132, 1
          %s602 = scalar_lea.sflag [#allocation4], %s601
          %s603 = sand.u32 %s132, 1
          %s604 = smul.addr %s603, 16
          %s605 = scalar_lea.vmem [#allocation7], %s604
          %606 = dma.done %s602, 256
        $region60: #{gat_forward.1} parent=55 // pred_fallthru
          _
        // Predicated region
        $region61: #{gat_forward.1} parent=55 // pred_check
          %p607 = pneg %p173
        $region62: #{gat_forward.1} parent=55 // pred_check_branch
          %609 = sbr.rel (%p607) target = $region64
        $region63: #{gat_forward.1} parent=55 // pred_region
          %s610 = sand.u32 %s158, 1
          %s611 = scalar_lea.sflag [#allocation9], %s610
          %s612 = sand.u32 %s158, 1
          %s613 = smul.addr %s612, 16
          %s614 = scalar_lea.vmem [#allocation8], %s613
          %615 = dma.done %s611, 256
        $region64: #{gat_forward.1} parent=55 // pred_fallthru
          _
      $region56: #{gat_forward.1} parent=5 // pred_fallthru
        _
    $region6: #{gat_forward.1} parent=1 // loop_footer
      %s28 = sadd.s32 1, %s24
    $region7: #{gat_forward.1} parent=1 // loop_footer_branch
      %23 = sbr.rel target = $region3
    $region8: #{gat_forward.1} parent=1 // loop_exit
      _
    %616 = vsyncpa [#allocation3], 1
    %s617 = scalar_lea.sflag [#allocation3], 1
    %618 = vsyncpa %s617, 1
    %619 = vsyncpa [#allocation6], 1
    %s620 = scalar_lea.sflag [#allocation6], 1
    %621 = vsyncpa %s620, 1
    %622 = vsyncpa [#allocation4], 1
    %s623 = scalar_lea.sflag [#allocation4], 1
    %624 = vsyncpa %s623, 1
    %625 = vsyncpa [#allocation9], 1
    %s626 = scalar_lea.sflag [#allocation9], 1
    %627 = vsyncpa %s626, 1

</llo_original>
